<compile_context>
chip_gen: v6e
topology: v6e:2x2x1
jax: 0.10.0
libtpu: 0.0.40
codegen_flags: <defaults>
</compile_context>

<pallas_src>
import functools

import jax
import jax.numpy as jnp
from jax.experimental import pallas as pl
from jax.experimental.pallas import tpu as pltpu


def _matmul_precision(dtype):
    # f32 operands: force the accurate multi-pass MXU path; the default
    # precision may downgrade f32 matmuls to ~bf16 accuracy.
    return jax.lax.Precision.HIGHEST if dtype == jnp.float32 else None


def _softmax_lastdim_f32(scores):
    """Numerically stable, exact f32 softmax over the last (key) axis."""
    m = jnp.max(scores, axis=-1, keepdims=True)
    e = jnp.exp(scores - m)
    return e / jnp.sum(e, axis=-1, keepdims=True)


def _attend(q, k, v, att_ref, distr_ref):
    # scores = q @ k^T (contract feature dims), f32 accumulation on the MXU.
    scores = jax.lax.dot_general(
        q, k, (((1,), (1,)), ((), ())),
        preferred_element_type=jnp.float32,
        precision=_matmul_precision(q.dtype))                  # (TQ, S)
    attn = _softmax_lastdim_f32(scores)                        # f32, exact
    out = jnp.dot(attn.astype(v.dtype), v,
                  preferred_element_type=jnp.float32,
                  precision=_matmul_precision(v.dtype))        # (TQ, Dv)
    att_ref[0] = out.astype(att_ref.dtype)
    distr_ref[0] = attn.astype(distr_ref.dtype)


def _luong_dot_kernel(mxu_dtype, v_ref, k_ref, q_ref, att_ref, distr_ref):
    q = q_ref[0]                      # (TQ, Dq)
    k = k_ref[0]                      # (S,  Dk)
    v = v_ref[0]                      # (S,  Dv)
    if mxu_dtype is not None:
        q, k, v = q.astype(mxu_dtype), k.astype(mxu_dtype), v.astype(mxu_dtype)
    _attend(q, k, v, att_ref, distr_ref)


def _luong_general_kernel(mxu_dtype, v_ref, k_ref, q_ref, w_ref, att_ref, distr_ref):
    q = q_ref[0]                      # (TQ, Dq)
    k = k_ref[0]                      # (S,  Dk)
    v = v_ref[0]                      # (S,  Dv)
    w = w_ref[...]                    # (Dk, Dq) == nn.Linear(query->key).weight
    if mxu_dtype is not None:
        q, k, v, w = (q.astype(mxu_dtype), k.astype(mxu_dtype),
                      v.astype(mxu_dtype), w.astype(mxu_dtype))
    # Project the query instead of the key: (q @ W) @ k^T == q @ (k @ W^T)^T.
    q_proj = jnp.dot(q, w, preferred_element_type=jnp.float32,
                     precision=_matmul_precision(q.dtype)).astype(q.dtype)
    _attend(q_proj, k, v, att_ref, distr_ref)


def _vmem_capacity_bytes():
    """Generation-aware VMEM capacity (v5e/v6e: 128 MiB, v7x: 64 MiB per TC)."""
    try:
        info = pltpu.get_tpu_info()
        cap = int(getattr(info, "vmem_capacity_bytes", 0))
        if cap > 0:
            return cap
    except Exception:
        pass
    return 64 * 1024 * 1024   # conservative fallback (v7x per-TensorCore)


@functools.partial(jax.jit, static_argnames=("score", "batch_first", "mxu_dtype"))
def luong_attention(value, key, query, W=None, *, score="dot", batch_first=True,
                    mxu_dtype=None):
    """Pallas implementation of LuongAttention.forward.

    Returns (attention, attention_distr) exactly like the PyTorch module.
    """
    if score not in ("dot", "general"):
        raise ValueError(
            "Invalid attention score `{}`. Use one of ['dot', 'general'].".format(score))

    if not batch_first:
        # (seq, batch, d) -> (batch, seq, d), like .transpose(0, 1)
        value = jnp.swapaxes(value, 0, 1)
        key = jnp.swapaxes(key, 0, 1)
        query = jnp.swapaxes(query, 0, 1)

    B, S, Dv = value.shape
    _, _, Dk = key.shape
    _, Q, Dq = query.shape

    # Both 'dot' and the module's 'general' score implicitly require Dk == Dq.
    assert Dk == Dq, "LuongAttention requires key_size == query_size"
    if score == "general":
        assert W is not None, "score='general' requires W of shape (key_size, query_size)"

    att_dtype = value.dtype
    distr_dtype = query.dtype
    itemsize = max(jnp.dtype(value.dtype).itemsize, jnp.dtype(query.dtype).itemsize)

    # ---- generation-aware VMEM sizing -------------------------------------
    cap = _vmem_capacity_bytes()
    budget = int(0.6 * cap)                       # working-set budget for tiling

    w_bytes = Dk * Dq * itemsize if score == "general" else 0
    kv_bytes = 2 * S * (Dk + Dv) * itemsize       # K/V (default double-buffered;
    # revisited -- not re-DMAed -- across query tiles since their block index
    # depends only on the batch axis).

    def step_bytes(tq):
        io = 2 * tq * (Dq + Dv + S) * itemsize    # q tile + att/distr tiles (x2 buffers)
        f32_tmp = 3 * tq * S * 4                  # scores / exp / attn f32 temporaries
        return kv_bytes + w_bytes + io + f32_tmp

    # ---- query tile size ----------------------------------------------------
    if step_bytes(Q) <= budget:
        TQ = Q                                    # single full-extent tile per batch
    else:
        TQ = min(128, Q)
        for cand in (1024, 512, 256):             # MXU-friendly multiples of 256
            if cand <= Q and step_bytes(cand) <= budget:
                TQ = cand
                break
    num_q_tiles = pl.cdiv(Q, TQ)
    grid = (B, num_q_tiles)

    vmem_limit = max(step_bytes(TQ) + (4 << 20), 32 << 20)
    vmem_limit = int(min(vmem_limit, int(0.85 * cap)))   # headroom for Mosaic scratch

    # ---- specs: full-extent last dims (no pad/slice passes, no key masking) --
    v_spec = pl.BlockSpec((1, S, Dv), lambda b, qi: (b, 0, 0))
    k_spec = pl.BlockSpec((1, S, Dk), lambda b, qi: (b, 0, 0))
    q_spec = pl.BlockSpec((1, TQ, Dq), lambda b, qi: (b, qi, 0))
    out_specs = (
        pl.BlockSpec((1, TQ, Dv), lambda b, qi: (b, qi, 0)),   # attention
        pl.BlockSpec((1, TQ, S), lambda b, qi: (b, qi, 0)),    # attention_distr
    )
    out_shapes = (
        jax.ShapeDtypeStruct((B, Q, Dv), att_dtype),
        jax.ShapeDtypeStruct((B, Q, S), distr_dtype),
    )

    # Megacore: shard over batch, keep K/V resident per core across query tiles.
    dim_sem = ("parallel", "parallel") if B == 1 else ("parallel", "arbitrary")
    compiler_params = pltpu.CompilerParams(
        dimension_semantics=dim_sem,
        vmem_limit_bytes=vmem_limit,
    )

    flops = 2.0 * B * Q * S * (Dk + Dv)
    if score == "general":
        flops += 2.0 * B * Q * Dq * Dk
    in_bytes = (value.size * value.dtype.itemsize
                + key.size * key.dtype.itemsize
                + query.size * query.dtype.itemsize)
    if score == "general":
        in_bytes += W.size * W.dtype.itemsize
    out_bytes = (B * Q * Dv * jnp.dtype(att_dtype).itemsize
                 + B * Q * S * jnp.dtype(distr_dtype).itemsize)
    cost = pl.CostEstimate(flops=int(flops), transcendentals=int(B * Q * S),
                           bytes_accessed=int(in_bytes + out_bytes))

    if score == "dot":
        att, distr = pl.pallas_call(
            functools.partial(_luong_dot_kernel, mxu_dtype),
            out_shape=out_shapes,
            grid=grid,
            in_specs=[v_spec, k_spec, q_spec],
            out_specs=out_specs,
            compiler_params=compiler_params,
            cost_estimate=cost,
        )(value, key, query)
    else:  # 'general'
        w_spec = pl.BlockSpec((Dk, Dq), lambda b, qi: (0, 0))
        att, distr = pl.pallas_call(
            functools.partial(_luong_general_kernel, mxu_dtype),
            out_shape=out_shapes,
            grid=grid,
            in_specs=[v_spec, k_spec, q_spec, w_spec],
            out_specs=out_specs,
            compiler_params=compiler_params,
            cost_estimate=cost,
        )(value, key, query, W)

    return att, distr


def _reference(value, key, query, W=None, score="dot"):
    # Pure-JAX reference of the PyTorch forward (batch_first=True), full precision.
    hi = jax.lax.Precision.HIGHEST
    if score == "general":
        key = jnp.einsum("bsd,kd->bsk", key, W, precision=hi)
    scores = jnp.einsum("bqd,bkd->bqk", query, key, precision=hi)
    attn = jax.nn.softmax(scores, axis=2)
    return jnp.einsum("bqk,bkd->bqd", attn, value, precision=hi), attn


if __name__ == "__main__":
    # Small shapes: batch=2, seq=8, q_seq=8, key_size=query_size=32, value_size=32
    B, S, Q, D, Dv = 2, 8, 8, 32, 32
    root = jax.random.PRNGKey(0)
    k_v, k_k, k_q, k_w = jax.random.split(root, 4)

    value = jax.random.normal(k_v, (B, S, Dv), dtype=jnp.float32)
    key = jax.random.normal(k_k, (B, S, D), dtype=jnp.float32)
    query = jax.random.normal(k_q, (B, Q, D), dtype=jnp.float32)
    # Kaiming-normal-like init for W (key_size, query_size), no bias.
    W = jax.random.normal(k_w, (D, D), dtype=jnp.float32) * jnp.sqrt(2.0 / D)

    # score='dot'
    att, distr = luong_attention(value, key, query, score="dot")
    jax.block_until_ready((att, distr))
    ref_att, ref_distr = _reference(value, key, query, score="dot")
    assert att.shape == ref_att.shape and distr.shape == ref_distr.shape
    assert jnp.allclose(att, ref_att, atol=2e-3, rtol=2e-3), \
        float(jnp.max(jnp.abs(att - ref_att)))
    assert jnp.allclose(distr, ref_distr, atol=2e-3, rtol=2e-3), \
        float(jnp.max(jnp.abs(distr - ref_distr)))

    # score='general'
    att_g, distr_g = luong_attention(value, key, query, W, score="general")
    jax.block_until_ready((att_g, distr_g))
    ref_att_g, ref_distr_g = _reference(value, key, query, W, score="general")
    assert att_g.shape == ref_att_g.shape and distr_g.shape == ref_distr_g.shape
    assert jnp.allclose(att_g, ref_att_g, atol=2e-3, rtol=2e-3), \
        float(jnp.max(jnp.abs(att_g - ref_att_g)))
    assert jnp.allclose(distr_g, ref_distr_g, atol=2e-3, rtol=2e-3), \
        float(jnp.max(jnp.abs(distr_g - ref_distr_g)))

    # batch_first=False path (inputs as (seq, batch, d)); outputs stay batch-first.
    att_nb, distr_nb = luong_attention(
        jnp.swapaxes(value, 0, 1), jnp.swapaxes(key, 0, 1), jnp.swapaxes(query, 0, 1),
        score="dot", batch_first=False)
    jax.block_until_ready((att_nb, distr_nb))
    assert jnp.allclose(att_nb, ref_att, atol=2e-3, rtol=2e-3)
    assert jnp.allclose(distr_nb, ref_distr, atol=2e-3, rtol=2e-3)

    print("KERNEL_OK")
</pallas_src>

<mosaic_0001>
module attributes {stable_mosaic.version = 11 : i64} {
  func.func @_luong_dot_kernel(%arg0: i32, %arg1: i32, %arg2: memref<1x8x32xf32, #tpu.memory_space<vmem>>, %arg3: memref<1x8x32xf32, #tpu.memory_space<vmem>>, %arg4: memref<1x8x32xf32, #tpu.memory_space<vmem>>, %arg5: memref<1x8x32xf32, #tpu.memory_space<vmem>>, %arg6: memref<1x8x8xf32, #tpu.memory_space<vmem>>) attributes {dimension_semantics = [#tpu.dimension_semantics<parallel>, #tpu.dimension_semantics<arbitrary>], iteration_bounds = array<i64: 2, 1>, scalar_prefetch = 0 : i64, scratch_operands = 0 : i64, tpu.core_type = #tpu.core_type<tc>, window_params = [{transform_indices = @transform_0, window_bounds = array<i64: 1, 8, 32>}, {transform_indices = @transform_1, window_bounds = array<i64: 1, 8, 32>}, {transform_indices = @transform_2, window_bounds = array<i64: 1, 8, 32>}, {transform_indices = @transform_3, window_bounds = array<i64: 1, 8, 32>}, {transform_indices = @transform_4, window_bounds = array<i64: 1, 8, 8>}]} {
    %c0 = arith.constant 0 : index
    %c0_0 = arith.constant 0 : index
    %c0_1 = arith.constant 0 : index
    %0 = vector.load %arg4[%c0, %c0_0, %c0_1] : memref<1x8x32xf32, #tpu.memory_space<vmem>>, vector<1x8x32xf32>
    %1 = vector.shape_cast %0 : vector<1x8x32xf32> to vector<8x32xf32>
    %c0_2 = arith.constant 0 : index
    %c0_3 = arith.constant 0 : index
    %c0_4 = arith.constant 0 : index
    %2 = vector.load %arg3[%c0_2, %c0_3, %c0_4] : memref<1x8x32xf32, #tpu.memory_space<vmem>>, vector<1x8x32xf32>
    %3 = vector.shape_cast %2 : vector<1x8x32xf32> to vector<8x32xf32>
    %c0_5 = arith.constant 0 : index
    %c0_6 = arith.constant 0 : index
    %c0_7 = arith.constant 0 : index
    %4 = vector.load %arg2[%c0_5, %c0_6, %c0_7] : memref<1x8x32xf32, #tpu.memory_space<vmem>>, vector<1x8x32xf32>
    %5 = vector.shape_cast %4 : vector<1x8x32xf32> to vector<8x32xf32>
    %cst = arith.constant dense<0.000000e+00> : vector<8x8xf32>
    %6 = tpu.matmul %1, %3, %cst {dimension_numbers = #tpu.dot_dimension_numbers<[1], [1], [0], [0], [0, 0, 1, 0], [], []>, precision = #tpu.contract_precision<fp32>} : vector<8x32xf32>, vector<8x32xf32>, vector<8x8xf32> -> vector<8x8xf32>
    %cst_8 = arith.constant dense<0xFF800000> : vector<8xf32>
    %7 = vector.multi_reduction <maximumf>, %6, %cst_8 [1] : vector<8x8xf32> to vector<8xf32>
    %8 = vector.shape_cast %7 : vector<8xf32> to vector<8x1xf32>
    %9 = vector.broadcast %8 : vector<8x1xf32> to vector<8x8xf32>
    %10 = arith.subf %6, %9 : vector<8x8xf32>
    %11 = math.exp %10 : vector<8x8xf32>
    %cst_9 = arith.constant dense<0.000000e+00> : vector<8xf32>
    %12 = vector.multi_reduction <add>, %11, %cst_9 [1] : vector<8x8xf32> to vector<8xf32>
    %13 = vector.shape_cast %12 : vector<8xf32> to vector<8x1xf32>
    %14 = vector.broadcast %13 : vector<8x1xf32> to vector<8x8xf32>
    %15 = arith.divf %11, %14 : vector<8x8xf32>
    %cst_10 = arith.constant dense<0.000000e+00> : vector<8x32xf32>
    %16 = tpu.matmul %15, %5, %cst_10 {dimension_numbers = #tpu.dot_dimension_numbers<[1], [0], [0], [1], [0, 0, 1, 1], [], []>, precision = #tpu.contract_precision<fp32>} : vector<8x8xf32>, vector<8x32xf32>, vector<8x32xf32> -> vector<8x32xf32>
    %c0_11 = arith.constant 0 : index
    %c0_12 = arith.constant 0 : index
    %c0_13 = arith.constant 0 : index
    %17 = vector.load %arg5[%c0_11, %c0_12, %c0_13] : memref<1x8x32xf32, #tpu.memory_space<vmem>>, vector<1x8x32xf32>
    %18 = vector.shape_cast %17 : vector<1x8x32xf32> to vector<8x32xf32>
    %19 = vector.shape_cast %16 : vector<8x32xf32> to vector<1x8x32xf32>
    tpu.vector_store %arg5[%c0_11, %c0_12, %c0_13], %19 {strides = array<i32>} : memref<1x8x32xf32, #tpu.memory_space<vmem>>, vector<1x8x32xf32>,
    %c0_14 = arith.constant 0 : index
    %c0_15 = arith.constant 0 : index
    %c0_16 = arith.constant 0 : index
    %20 = vector.load %arg6[%c0_14, %c0_15, %c0_16] : memref<1x8x8xf32, #tpu.memory_space<vmem>>, vector<1x8x8xf32>
    %21 = vector.shape_cast %20 : vector<1x8x8xf32> to vector<8x8xf32>
    %22 = vector.shape_cast %15 : vector<8x8xf32> to vector<1x8x8xf32>
    tpu.vector_store %arg6[%c0_14, %c0_15, %c0_16], %22 {strides = array<i32>} : memref<1x8x8xf32, #tpu.memory_space<vmem>>, vector<1x8x8xf32>,
    return
  }
  func.func @transform_0(%arg0: i32, %arg1: i32) -> (i32, i32, i32) {
    %c0_i32 = arith.constant 0 : i32
    %c0_i32_0 = arith.constant 0 : i32
    %c0_i32_1 = arith.constant 0 : i32
    return %arg0, %c0_i32, %c0_i32_0 : i32, i32, i32
  }
  func.func @transform_1(%arg0: i32, %arg1: i32) -> (i32, i32, i32) {
    %c0_i32 = arith.constant 0 : i32
    %c0_i32_0 = arith.constant 0 : i32
    %c0_i32_1 = arith.constant 0 : i32
    return %arg0, %c0_i32, %c0_i32_0 : i32, i32, i32
  }
  func.func @transform_2(%arg0: i32, %arg1: i32) -> (i32, i32, i32) {
    %c0_i32 = arith.constant 0 : i32
    %c0_i32_0 = arith.constant 0 : i32
    return %arg0, %arg1, %c0_i32 : i32, i32, i32
  }
  func.func @transform_3(%arg0: i32, %arg1: i32) -> (i32, i32, i32) {
    %c0_i32 = arith.constant 0 : i32
    %c0_i32_0 = arith.constant 0 : i32
    return %arg0, %arg1, %c0_i32 : i32, i32, i32
  }
  func.func @transform_4(%arg0: i32, %arg1: i32) -> (i32, i32, i32) {
    %c0_i32 = arith.constant 0 : i32
    %c0_i32_0 = arith.constant 0 : i32
    return %arg0, %arg1, %c0_i32 : i32, i32, i32
  }
}

</mosaic_0001>

<llo_original>
// kernel: luong_attention.1
$region0: #{luong_attention.1}
  #allocation0 [shape = 'u32[]', space=smem, size = 0x4, offset = 0x4, fixed_abs, tag = 'smem constant byte address 0x4 - core index']
  #allocation1 [shape = 'u32[144,128]{1,0:T(1,128)}', space=vmem, size = 0x12000, scoped, tag = 'internal scratch']
  %s0 = inlined_call_operand.hbm [shape: f32[2,8,32], index: 0, kind: input, shape index: {}]
  %s1 = inlined_call_operand.hbm [shape: f32[2,8,32], index: 1, kind: input, shape index: {}]
  %s2 = inlined_call_operand.hbm [shape: f32[2,8,32], index: 2, kind: input, shape index: {}]
  %s3 = inlined_call_operand.hbm [shape: f32[2,8,32], index: 3, kind: output, shape index: {0}]
  %s4 = inlined_call_operand.hbm [shape: f32[2,8,8], index: 4, kind: output, shape index: {1}]
  %5 = xla_tuple %s3, %s4
  %s6 = sld [smem:[#allocation0]]
  $region65: #{luong_attention.1} parent=0
    _
  %s8 = ssub.s32 1, %s6
  %s9 = scalar_select 0, %s8, %s6
  $region1: #{luong_attention.1} parent=0
    #allocation2 [shape = 'u8[8192]{0}', space=vmem, size = 0x2000, scoped, tag = 'input window, operand 0']
    #allocation3 [shape = 's32[2]{0}', space=sflag, size = 0x8, scoped, tag = 'scoped memory for luong_attention.1']
    #allocation4 [shape = 's32[2]{0}', space=sflag, size = 0x8, scoped, tag = 'scoped memory for luong_attention.1']
    #allocation5 [shape = 'u8[8192]{0}', space=vmem, size = 0x2000, scoped, tag = 'input window, operand 1']
    #allocation6 [shape = 's32[2]{0}', space=sflag, size = 0x8, scoped, tag = 'scoped memory for luong_attention.1']
    #allocation7 [shape = 'u8[8192]{0}', space=vmem, size = 0x2000, scoped, tag = 'input window, operand 2']
    #allocation8 [shape = 'u8[8192]{0}', space=vmem, size = 0x2000, scoped, tag = 'output window, operand 0']
    #allocation9 [shape = 'u8[8192]{0}', space=vmem, size = 0x2000, scoped, tag = 'output window, operand 1']
    #allocation10 [shape = 's32[2]{0}', space=sflag, size = 0x8, scoped, tag = 'scoped memory for luong_attention.1']
    %10 = vsyncpa [#allocation3], 0
    %s11 = scalar_lea.sflag [#allocation3], 1
    %12 = vsyncpa %s11, 0
    %13 = vsyncpa [#allocation6], 0
    %s14 = scalar_lea.sflag [#allocation6], 1
    %15 = vsyncpa %s14, 0
    %16 = vsyncpa [#allocation4], 0
    %s17 = scalar_lea.sflag [#allocation4], 1
    %18 = vsyncpa %s17, 0
    %19 = vsyncpa [#allocation10], 0
    %s20 = scalar_lea.sflag [#allocation10], 1
    %21 = vsyncpa %s20, 0
    loop: start=0, step=1, limit=4
    $region2: #{luong_attention.1} parent=1 // loop_pre_header
      _
    $region3: #{luong_attention.1} parent=1 // loop_header
      %s23 = sphi 0, %s27
      %p24 = scmp.ge.s32.totalorder %s23, 4
      %s30 = sphi 0, %s42
      %s31 = sphi 0, %s38
      %s32 = sphi 0, %s30
      %s33 = sphi 0, %s31
      %s34 = sphi 0, %s32
      %s35 = sphi 0, %s33
      %s45 = sphi 0, %s47
      %s48 = sphi 0, %s45
      %s49 = sphi 0, %s48
      %s65 = sphi 0, %s49
      %s71 = sphi 0, %s73
      %s74 = sphi 0, %s71
      %s75 = sphi 0, %s74
      %s91 = sphi 0, %s75
      %s99 = sphi 0, %s101
      %s102 = sphi 0, %s99
      %s103 = sphi 0, %s102
      %s119 = sphi 0, %s103
      %s127 = sphi 0, %s129
      %s130 = sphi 0, %s127
      %s131 = sphi 0, %s130
      %s147 = sphi 0, %s131
      %s155 = sphi 0, %s157
      %s158 = sphi 0, %s155
      %s159 = sphi 0, %s158
      %s175 = sphi 0, %s159
    $region4: #{luong_attention.1} parent=1 // loop_header_branch
      %26 = sbr.rel (%p24) target = $region8
    $region5: #{luong_attention.1} parent=1 // loop_body
      %s28 = ssub.s32 %s23, 1
      %s29 = ssub.s32 %s23, 2
      %s36 = sadd.s32 1, %s31
      %p37 = scmp.ge.s32.totalorder %s36, 1
      %s38 = scalar_select %p37, 0, %s36
      %s39 = sadd.s32 1, %s30
      %s40 = scalar_select %p37, %s39, %s30
      %p41 = scmp.ge.s32.totalorder %s40, 2
      %s42 = scalar_select %p41, 0, %s40
      %s43 = ssub.s32 %s30, %s42
      %p44 = scmp.eq.s32.totalorder %s43, 0
      %s46 = sadd.s32 %s45, 1
      %s47 = scalar_select %p44, %s45, %s46
      %p50 = pneg %p44
      %p51 = scmp.eq.s32.totalorder %s23, 1
      %p52 = por %p50, %p51
      %p53 = scmp.ne.s32.totalorder %s45, %s48
      %p54 = scmp.eq.s32.totalorder %s23, 0
      %p55 = por %p53, %p54
      %p56 = scmp.ne.s32.totalorder %s45, %s48
      %p57 = scmp.eq.s32.totalorder %s28, 1
      %p58 = por %p56, %p57
      %p59 = scmp.ne.s32.totalorder %s48, %s49
      %p60 = scmp.eq.s32.totalorder %s28, 0
      %p61 = por %p59, %p60
      %p62 = scmp.ne.s32.totalorder %s48, %s49
      %p63 = scmp.eq.s32.totalorder %s29, 1
      %p64 = por %p62, %p63
      %p66 = scmp.ne.s32.totalorder %s49, %s65
      %p67 = scmp.eq.s32.totalorder %s29, 0
      %p68 = por %p66, %p67
      %s69 = ssub.s32 %s30, %s42
      %p70 = scmp.eq.s32.totalorder %s69, 0
      %s72 = sadd.s32 %s71, 1
      %s73 = scalar_select %p70, %s71, %s72
      %p76 = pneg %p70
      %p77 = scmp.eq.s32.totalorder %s23, 1
      %p78 = por %p76, %p77
      %p79 = scmp.ne.s32.totalorder %s71, %s74
      %p80 = scmp.eq.s32.totalorder %s23, 0
      %p81 = por %p79, %p80
      %p82 = scmp.ne.s32.totalorder %s71, %s74
      %p83 = scmp.eq.s32.totalorder %s28, 1
      %p84 = por %p82, %p83
      %p85 = scmp.ne.s32.totalorder %s74, %s75
      %p86 = scmp.eq.s32.totalorder %s28, 0
      %p87 = por %p85, %p86
      %p88 = scmp.ne.s32.totalorder %s74, %s75
      %p89 = scmp.eq.s32.totalorder %s29, 1
      %p90 = por %p88, %p89
      %p92 = scmp.ne.s32.totalorder %s75, %s91
      %p93 = scmp.eq.s32.totalorder %s29, 0
      %p94 = por %p92, %p93
      %s95 = ssub.s32 %s30, %s42
      %s96 = ssub.s32 %s31, %s38
      %s97 = sor.u32 %s95, %s96
      %p98 = scmp.eq.s32.totalorder %s97, 0
      %s100 = sadd.s32 %s99, 1
      %s101 = scalar_select %p98, %s99, %s100
      %p104 = pneg %p98
      %p105 = scmp.eq.s32.totalorder %s23, 1
      %p106 = por %p104, %p105
      %p107 = scmp.ne.s32.totalorder %s99, %s102
      %p108 = scmp.eq.s32.totalorder %s23, 0
      %p109 = por %p107, %p108
      %p110 = scmp.ne.s32.totalorder %s99, %s102
      %p111 = scmp.eq.s32.totalorder %s28, 1
      %p112 = por %p110, %p111
      %p113 = scmp.ne.s32.totalorder %s102, %s103
      %p114 = scmp.eq.s32.totalorder %s28, 0
      %p115 = por %p113, %p114
      %p116 = scmp.ne.s32.totalorder %s102, %s103
      %p117 = scmp.eq.s32.totalorder %s29, 1
      %p118 = por %p116, %p117
      %p120 = scmp.ne.s32.totalorder %s103, %s119
      %p121 = scmp.eq.s32.totalorder %s29, 0
      %p122 = por %p120, %p121
      %s123 = ssub.s32 %s30, %s42
      %s124 = ssub.s32 %s31, %s38
      %s125 = sor.u32 %s123, %s124
      %p126 = scmp.eq.s32.totalorder %s125, 0
      %s128 = sadd.s32 %s127, 1
      %s129 = scalar_select %p126, %s127, %s128
      %p132 = pneg %p126
      %p133 = scmp.eq.s32.totalorder %s23, 1
      %p134 = por %p132, %p133
      %p135 = scmp.ne.s32.totalorder %s127, %s130
      %p136 = scmp.eq.s32.totalorder %s23, 0
      %p137 = por %p135, %p136
      %p138 = scmp.ne.s32.totalorder %s127, %s130
      %p139 = scmp.eq.s32.totalorder %s28, 1
      %p140 = por %p138, %p139
      %p141 = scmp.ne.s32.totalorder %s130, %s131
      %p142 = scmp.eq.s32.totalorder %s28, 0
      %p143 = por %p141, %p142
      %p144 = scmp.ne.s32.totalorder %s130, %s131
      %p145 = scmp.eq.s32.totalorder %s29, 1
      %p146 = por %p144, %p145
      %p148 = scmp.ne.s32.totalorder %s131, %s147
      %p149 = scmp.eq.s32.totalorder %s29, 0
      %p150 = por %p148, %p149
      %s151 = ssub.s32 %s30, %s42
      %s152 = ssub.s32 %s31, %s38
      %s153 = sor.u32 %s151, %s152
      %p154 = scmp.eq.s32.totalorder %s153, 0
      %s156 = sadd.s32 %s155, 1
      %s157 = scalar_select %p154, %s155, %s156
      %p160 = pneg %p154
      %p161 = scmp.eq.s32.totalorder %s23, 1
      %p162 = por %p160, %p161
      %p163 = scmp.ne.s32.totalorder %s155, %s158
      %p164 = scmp.eq.s32.totalorder %s23, 0
      %p165 = por %p163, %p164
      %p166 = scmp.ne.s32.totalorder %s155, %s158
      %p167 = scmp.eq.s32.totalorder %s28, 1
      %p168 = por %p166, %p167
      %p169 = scmp.ne.s32.totalorder %s158, %s159
      %p170 = scmp.eq.s32.totalorder %s28, 0
      %p171 = por %p169, %p170
      %p172 = scmp.ne.s32.totalorder %s158, %s159
      %p173 = scmp.eq.s32.totalorder %s29, 1
      %p174 = por %p172, %p173
      %p176 = scmp.ne.s32.totalorder %s159, %s175
      %p177 = scmp.eq.s32.totalorder %s29, 0
      %p178 = por %p176, %p177
      %p179 = scmp.le.s32.totalorder 1, %s23
      %p180 = scmp.lt.s32.totalorder %s23, 3
      %p181 = pnand %p179, %p180
      %p182 = pneg %p181
      // Predicated region
      $region9: #{luong_attention.1} parent=5 // pred_check
        _
      $region10: #{luong_attention.1} parent=5 // pred_check_branch
        %184 = sbr.rel (%p181) target = $region12
      $region11: #{luong_attention.1} parent=5 // pred_region
        %s185 = ssub.s32 %s23, 1
      $region12: #{luong_attention.1} parent=5 // pred_fallthru
        _
      %p186 = scmp.lt.s32.totalorder %s23, 2
      // Predicated region
      $region13: #{luong_attention.1} parent=5 // pred_check
        %p187 = pneg %p186
      $region14: #{luong_attention.1} parent=5 // pred_check_branch
        %189 = sbr.rel (%p187) target = $region16
      $region15: #{luong_attention.1} parent=5 // pred_region
        // Predicated region
        $region17: #{luong_attention.1} parent=15 // pred_check
          %p190 = pneg %p55
        $region18: #{luong_attention.1} parent=15 // pred_check_branch
          %192 = sbr.rel (%p190) target = $region20
        $region19: #{luong_attention.1} parent=15 // pred_region
          %s193 = sand.u32 %s45, 1
          %s194 = scalar_lea.sflag [#allocation3], %s193
          %s195 = sand.u32 %s45, 1
          %s196 = smul.addr %s195, 8
          %s197 = scalar_lea.vmem [#allocation2], %s196
          %s199 = ssub.s32 128, 128
          %200 = vsyncadd %s194, %s199
          %s201 = smul.addr %s30, 128
          %s202 = scalar_lea.hbm %s0, %s201
          %s204 = sshll.u32 %s197, 4
          %s205 = int_to_ptr.vmem [resolvable:$true] %s204
          %207 = dma.hbm_to_vmem [thread:$0]  %s202, 128, %s205, %s194
        $region20: #{luong_attention.1} parent=15 // pred_fallthru
          _
        // Predicated region
        $region21: #{luong_attention.1} parent=15 // pred_check
          %p208 = pneg %p81
        $region22: #{luong_attention.1} parent=15 // pred_check_branch
          %210 = sbr.rel (%p208) target = $region24
        $region23: #{luong_attention.1} parent=15 // pred_region
          %s211 = sand.u32 %s23, 1
          %s212 = scalar_lea.sflag [#allocation6], %s211
          %s213 = sand.u32 %s71, 1
          %s214 = smul.addr %s213, 8
          %s215 = scalar_lea.vmem [#allocation5], %s214
          %s217 = ssub.s32 128, 128
          %218 = vsyncadd %s212, %s217
          %s219 = smul.addr %s30, 128
          %s220 = scalar_lea.hbm %s1, %s219
          %s222 = sshll.u32 %s215, 4
          %s223 = int_to_ptr.vmem [resolvable:$true] %s222
          %225 = dma.hbm_to_vmem [thread:$0]  %s220, 128, %s223, %s212
        $region24: #{luong_attention.1} parent=15 // pred_fallthru
          _
        // Predicated region
        $region25: #{luong_attention.1} parent=15 // pred_check
          %p226 = pneg %p109
        $region26: #{luong_attention.1} parent=15 // pred_check_branch
          %228 = sbr.rel (%p226) target = $region28
        $region27: #{luong_attention.1} parent=15 // pred_region
          %s229 = sand.u32 %s23, 1
          %s230 = scalar_lea.sflag [#allocation6], %s229
          %s231 = sand.u32 %s99, 1
          %s232 = smul.addr %s231, 8
          %s233 = scalar_lea.vmem [#allocation7], %s232
          %s235 = ssub.s32 128, 128
          %236 = vsyncadd %s230, %s235
          %s237 = sadd.s32 %s31, %s30
          %s238 = smul.addr %s237, 128
          %s239 = scalar_lea.hbm %s2, %s238
          %s241 = sshll.u32 %s233, 4
          %s242 = int_to_ptr.vmem [resolvable:$true] %s241
          %244 = dma.hbm_to_vmem [thread:$0]  %s239, 128, %s242, %s230
        $region28: #{luong_attention.1} parent=15 // pred_fallthru
          _
      $region16: #{luong_attention.1} parent=5 // pred_fallthru
        _
      %p245 = scmp.le.s32.totalorder 1, %s23
      %p246 = scmp.lt.s32.totalorder %s23, 3
      %p247 = pnand %p245, %p246
      %p248 = pneg %p247
      // Predicated region
      $region29: #{luong_attention.1} parent=5 // pred_check
        _
      $region30: #{luong_attention.1} parent=5 // pred_check_branch
        %250 = sbr.rel (%p247) target = $region32
      $region31: #{luong_attention.1} parent=5 // pred_region
        %s251 = ssub.s32 %s23, 1
        %s252 = sand.u32 %s48, 1
        %s253 = scalar_lea.sflag [#allocation3], %s252
        %s254 = sand.u32 %s48, 1
        %s255 = smul.addr %s254, 8
        %s256 = scalar_lea.vmem [#allocation2], %s255
        // Predicated region
        $region33: #{luong_attention.1} parent=31 // pred_check
          %p257 = pneg %p61
        $region34: #{luong_attention.1} parent=31 // pred_check_branch
          %259 = sbr.rel (%p257) target = $region36
        $region35: #{luong_attention.1} parent=31 // pred_region
          %260 = dma.done %s253, 128
        $region36: #{luong_attention.1} parent=31 // pred_fallthru
          _
        %s261 = sand.u32 %s28, 1
        %s262 = scalar_lea.sflag [#allocation6], %s261
        %s263 = sand.u32 %s74, 1
        %s264 = smul.addr %s263, 8
        %s265 = scalar_lea.vmem [#allocation5], %s264
        // Predicated region
        $region37: #{luong_attention.1} parent=31 // pred_check
          %p266 = pneg %p87
        $region38: #{luong_attention.1} parent=31 // pred_check_branch
          %268 = sbr.rel (%p266) target = $region40
        $region39: #{luong_attention.1} parent=31 // pred_region
          %269 = dma.done %s262, 128
        $region40: #{luong_attention.1} parent=31 // pred_fallthru
          _
        %s270 = sand.u32 %s28, 1
        %s271 = scalar_lea.sflag [#allocation6], %s270
        %s272 = sand.u32 %s102, 1
        %s273 = smul.addr %s272, 8
        %s274 = scalar_lea.vmem [#allocation7], %s273
        // Predicated region
        $region41: #{luong_attention.1} parent=31 // pred_check
          %p275 = pneg %p115
        $region42: #{luong_attention.1} parent=31 // pred_check_branch
          %277 = sbr.rel (%p275) target = $region44
        $region43: #{luong_attention.1} parent=31 // pred_region
          %278 = dma.done %s271, 128
        $region44: #{luong_attention.1} parent=31 // pred_fallthru
          _
        %s279 = sand.u32 %s48, 1
        %s280 = scalar_lea.sflag [#allocation3], %s279
        %s281 = sand.u32 %s48, 1
        %s282 = smul.addr %s281, 8
        %s283 = scalar_lea.vmem [#allocation2], %s282
        %p284 = pneg %p61
        %p285 = pneg %p58
        %s286 = sand.u32 %s28, 1
        %s287 = scalar_lea.sflag [#allocation6], %s286
        %s288 = sand.u32 %s74, 1
        %s289 = smul.addr %s288, 8
        %s290 = scalar_lea.vmem [#allocation5], %s289
        %p291 = pneg %p87
        %p292 = pneg %p84
        %s293 = sand.u32 %s28, 1
        %s294 = scalar_lea.sflag [#allocation6], %s293
        %s295 = sand.u32 %s102, 1
        %s296 = smul.addr %s295, 8
        %s297 = scalar_lea.vmem [#allocation7], %s296
        %p298 = pneg %p115
        %p299 = pneg %p112
        %p300 = pneg %p143
        %p301 = pneg %p140
        %s302 = sand.u32 %s130, 1
        %s303 = scalar_lea.sflag [#allocation4], %s302
        %s304 = sand.u32 %s130, 1
        %s305 = smul.addr %s304, 8
        %s306 = scalar_lea.vmem [#allocation8], %s305
        %p307 = pneg %p171
        %p308 = pneg %p168
        %s309 = sand.u32 %s158, 1
        %s310 = scalar_lea.sflag [#allocation10], %s309
        %s311 = sand.u32 %s158, 1
        %s312 = smul.addr %s311, 8
        %s313 = scalar_lea.vmem [#allocation9], %s312
        %v314 = vld [vmem:[%s274] sm:$0xff]
        %v315 = vld [vmem:[%s265] sm:$0xff]
        %v316 = vld [vmem:[%s256] sm:$0xff]
        %vm317 = vcmask 261120
        %v319 = vsel %vm317, %v314, 0
        %v322 = vsel %vm317, %v315, 0
        %324 = vmatprep.subr.mxu0 0.0
        %325 = vmatpush1.xpose.msra.mxu0 0.0
        %326 = vmatprep.subr.mxu0 0.0
        %327 = vmatpush1.xpose.msra.mxu0 0.0
        %328 = vmatprep.subr.mxu0 0.0
        %329 = vmatpush1.xpose.msra.mxu0 0.0
        %330 = vmatprep.subr.mxu0 0.0
        %331 = vmatpush1.xpose.msra.mxu0 0.0
        %332 = vmatprep.subr.mxu0 0.0
        %333 = vmatpush1.xpose.msra.mxu0 0.0
        %334 = vmatprep.subr.mxu0 0.0
        %335 = vmatpush1.xpose.msra.mxu0 0.0
        %336 = vmatprep.subr.mxu0 0.0
        %337 = vmatpush1.xpose.msra.mxu0 0.0
        %338 = vmatprep.subr.mxu0 0.0
        %339 = vmatpush1.xpose.msra.mxu0 0.0
        %340 = vmatprep.subr.mxu0 0.0
        %341 = vmatpush1.xpose.msra.mxu0 0.0
        %342 = vmatprep.subr.mxu0 0.0
        %343 = vmatpush1.xpose.msra.mxu0 0.0
        %344 = vmatprep.subr.mxu0 0.0
        %345 = vmatpush1.xpose.msra.mxu0 0.0
        %346 = vmatprep.subr.mxu0 0.0
        %347 = vmatpush1.xpose.msra.mxu0 0.0
        %348 = vmatprep.subr.mxu0 0.0
        %349 = vmatpush1.xpose.msra.mxu0 0.0
        %350 = vmatprep.subr.mxu0 0.0
        %351 = vmatpush1.xpose.msra.mxu0 0.0
        %352 = vmatprep.subr.mxu0 0.0
        %353 = vmatpush1.xpose.msra.mxu0 0.0
        %354 = vmatprep.subr.mxu0 0.0
        %v355 = vand.u32 %v322, 4294901760
        %356 = vmatpush1.xpose.msra.mxu0 %v355
        %357 = vmatprep.subr.mxu0 0.0
        %358 = vmatpush2.xpose.msra.mxu0 0.0
        %359 = vmatprep.subr.mxu0 0.0
        %360 = vmatpush2.xpose.msra.mxu0 0.0
        %361 = vmatprep.subr.mxu0 0.0
        %362 = vmatpush2.xpose.msra.mxu0 0.0
        %363 = vmatprep.subr.mxu0 0.0
        %364 = vmatpush2.xpose.msra.mxu0 0.0
        %365 = vmatprep.subr.mxu0 0.0
        %366 = vmatpush2.xpose.msra.mxu0 0.0
        %367 = vmatprep.subr.mxu0 0.0
        %368 = vmatpush2.xpose.msra.mxu0 0.0
        %369 = vmatprep.subr.mxu0 0.0
        %370 = vmatpush2.xpose.msra.mxu0 0.0
        %371 = vmatprep.subr.mxu0 0.0
        %372 = vmatpush2.xpose.msra.mxu0 0.0
        %373 = vmatprep.subr.mxu0 0.0
        %374 = vmatpush2.xpose.msra.mxu0 0.0
        %375 = vmatprep.subr.mxu0 0.0
        %376 = vmatpush2.xpose.msra.mxu0 0.0
        %377 = vmatprep.subr.mxu0 0.0
        %378 = vmatpush2.xpose.msra.mxu0 0.0
        %379 = vmatprep.subr.mxu0 0.0
        %380 = vmatpush2.xpose.msra.mxu0 0.0
        %381 = vmatprep.subr.mxu0 0.0
        %382 = vmatpush2.xpose.msra.mxu0 0.0
        %383 = vmatprep.subr.mxu0 0.0
        %384 = vmatpush2.xpose.msra.mxu0 0.0
        %385 = vmatprep.subr.mxu0 0.0
        %386 = vmatpush2.xpose.msra.mxu0 0.0
        %387 = vmatprep.subr.mxu0 0.0
        %388 = vmatpush2.xpose.msra.mxu0 0.0
        %389 = vmatprep.mubr.f32.mxu0 0.0
        %v390 = vand.u32 %v319, 4294901760
        %v391 = vsub.f32 %v319, %v390
        %v392 = vand.u32 %v391, 4294901760
        %v393 = vsub.f32 %v391, %v392
        %v394 = vand.u32 %v393, 4294901760
        %395 = vmatmul.mubr.f32.gmra.mxu0 %v394
        %v396 = vpop.f32.mrf.mxu0
        %v397 = vadd.f32 0.0, %v396
        %v398 = vpop.f32.mrf.mxu0
        %399 = vdwg.mxu0
        %400 = vmatprep.subr.mxu0 0.0
        %401 = vmatpush1.xpose.msra.mxu0 0.0
        %402 = vmatprep.subr.mxu0 0.0
        %403 = vmatpush1.xpose.msra.mxu0 0.0
        %404 = vmatprep.subr.mxu0 0.0
        %405 = vmatpush1.xpose.msra.mxu0 0.0
        %406 = vmatprep.subr.mxu0 0.0
        %407 = vmatpush1.xpose.msra.mxu0 0.0
        %408 = vmatprep.subr.mxu0 0.0
        %409 = vmatpush1.xpose.msra.mxu0 0.0
        %410 = vmatprep.subr.mxu0 0.0
        %411 = vmatpush1.xpose.msra.mxu0 0.0
        %412 = vmatprep.subr.mxu0 0.0
        %413 = vmatpush1.xpose.msra.mxu0 0.0
        %414 = vmatprep.subr.mxu0 0.0
        %415 = vmatpush1.xpose.msra.mxu0 0.0
        %416 = vmatprep.subr.mxu0 0.0
        %417 = vmatpush1.xpose.msra.mxu0 0.0
        %418 = vmatprep.subr.mxu0 0.0
        %419 = vmatpush1.xpose.msra.mxu0 0.0
        %420 = vmatprep.subr.mxu0 0.0
        %421 = vmatpush1.xpose.msra.mxu0 0.0
        %422 = vmatprep.subr.mxu0 0.0
        %423 = vmatpush1.xpose.msra.mxu0 0.0
        %424 = vmatprep.subr.mxu0 0.0
        %425 = vmatpush1.xpose.msra.mxu0 0.0
        %426 = vmatprep.subr.mxu0 0.0
        %427 = vmatpush1.xpose.msra.mxu0 0.0
        %428 = vmatprep.subr.mxu0 0.0
        %429 = vmatpush1.xpose.msra.mxu0 0.0
        %430 = vmatprep.subr.mxu0 0.0
        %v431 = vand.u32 %v322, 4294901760
        %v432 = vsub.f32 %v322, %v431
        %v433 = vand.u32 %v432, 4294901760
        %v434 = vsub.f32 %v432, %v433
        %v435 = vand.u32 %v434, 4294901760
        %436 = vmatpush1.xpose.msra.mxu0 %v435
        %437 = vmatprep.subr.mxu0 0.0
        %438 = vmatpush2.xpose.msra.mxu0 0.0
        %439 = vmatprep.subr.mxu0 0.0
        %440 = vmatpush2.xpose.msra.mxu0 0.0
        %441 = vmatprep.subr.mxu0 0.0
        %442 = vmatpush2.xpose.msra.mxu0 0.0
        %443 = vmatprep.subr.mxu0 0.0
        %444 = vmatpush2.xpose.msra.mxu0 0.0
        %445 = vmatprep.subr.mxu0 0.0
        %446 = vmatpush2.xpose.msra.mxu0 0.0
        %447 = vmatprep.subr.mxu0 0.0
        %448 = vmatpush2.xpose.msra.mxu0 0.0
        %449 = vmatprep.subr.mxu0 0.0
        %450 = vmatpush2.xpose.msra.mxu0 0.0
        %451 = vmatprep.subr.mxu0 0.0
        %452 = vmatpush2.xpose.msra.mxu0 0.0
        %453 = vmatprep.subr.mxu0 0.0
        %454 = vmatpush2.xpose.msra.mxu0 0.0
        %455 = vmatprep.subr.mxu0 0.0
        %456 = vmatpush2.xpose.msra.mxu0 0.0
        %457 = vmatprep.subr.mxu0 0.0
        %458 = vmatpush2.xpose.msra.mxu0 0.0
        %459 = vmatprep.subr.mxu0 0.0
        %460 = vmatpush2.xpose.msra.mxu0 0.0
        %461 = vmatprep.subr.mxu0 0.0
        %462 = vmatpush2.xpose.msra.mxu0 0.0
        %463 = vmatprep.subr.mxu0 0.0
        %464 = vmatpush2.xpose.msra.mxu0 0.0
        %465 = vmatprep.subr.mxu0 0.0
        %466 = vmatpush2.xpose.msra.mxu0 0.0
        %467 = vmatprep.subr.mxu0 0.0
        %468 = vmatpush2.xpose.msra.mxu0 0.0
        %469 = vmatprep.mubr.f32.mxu0 0.0
        %v470 = vand.u32 %v319, 4294901760
        %471 = vmatmul.mubr.f32.gmra.mxu0 %v470
        %v472 = vpop.f32.mrf.mxu0
        %v473 = vadd.f32 %v397, %v472
        %v474 = vpop.f32.mrf.mxu0
        %475 = vdwg.mxu0
        %476 = vmatprep.subr.mxu0 0.0
        %477 = vmatpush1.xpose.msra.mxu0 0.0
        %478 = vmatprep.subr.mxu0 0.0
        %479 = vmatpush1.xpose.msra.mxu0 0.0
        %480 = vmatprep.subr.mxu0 0.0
        %481 = vmatpush1.xpose.msra.mxu0 0.0
        %482 = vmatprep.subr.mxu0 0.0
        %483 = vmatpush1.xpose.msra.mxu0 0.0
        %484 = vmatprep.subr.mxu0 0.0
        %485 = vmatpush1.xpose.msra.mxu0 0.0
        %486 = vmatprep.subr.mxu0 0.0
        %487 = vmatpush1.xpose.msra.mxu0 0.0
        %488 = vmatprep.subr.mxu0 0.0
        %489 = vmatpush1.xpose.msra.mxu0 0.0
        %490 = vmatprep.subr.mxu0 0.0
        %491 = vmatpush1.xpose.msra.mxu0 0.0
        %492 = vmatprep.subr.mxu0 0.0
        %493 = vmatpush1.xpose.msra.mxu0 0.0
        %494 = vmatprep.subr.mxu0 0.0
        %495 = vmatpush1.xpose.msra.mxu0 0.0
        %496 = vmatprep.subr.mxu0 0.0
        %497 = vmatpush1.xpose.msra.mxu0 0.0
        %498 = vmatprep.subr.mxu0 0.0
        %499 = vmatpush1.xpose.msra.mxu0 0.0
        %500 = vmatprep.subr.mxu0 0.0
        %501 = vmatpush1.xpose.msra.mxu0 0.0
        %502 = vmatprep.subr.mxu0 0.0
        %503 = vmatpush1.xpose.msra.mxu0 0.0
        %504 = vmatprep.subr.mxu0 0.0
        %505 = vmatpush1.xpose.msra.mxu0 0.0
        %506 = vmatprep.subr.mxu0 0.0
        %v507 = vand.u32 %v322, 4294901760
        %v508 = vsub.f32 %v322, %v507
        %509 = vmatpush1.xpose.msra.mxu0 %v508
        %510 = vmatprep.subr.mxu0 0.0
        %511 = vmatpush2.xpose.msra.mxu0 0.0
        %512 = vmatprep.subr.mxu0 0.0
        %513 = vmatpush2.xpose.msra.mxu0 0.0
        %514 = vmatprep.subr.mxu0 0.0
        %515 = vmatpush2.xpose.msra.mxu0 0.0
        %516 = vmatprep.subr.mxu0 0.0
        %517 = vmatpush2.xpose.msra.mxu0 0.0
        %518 = vmatprep.subr.mxu0 0.0
        %519 = vmatpush2.xpose.msra.mxu0 0.0
        %520 = vmatprep.subr.mxu0 0.0
        %521 = vmatpush2.xpose.msra.mxu0 0.0
        %522 = vmatprep.subr.mxu0 0.0
        %523 = vmatpush2.xpose.msra.mxu0 0.0
        %524 = vmatprep.subr.mxu0 0.0
        %525 = vmatpush2.xpose.msra.mxu0 0.0
        %526 = vmatprep.subr.mxu0 0.0
        %527 = vmatpush2.xpose.msra.mxu0 0.0
        %528 = vmatprep.subr.mxu0 0.0
        %529 = vmatpush2.xpose.msra.mxu0 0.0
        %530 = vmatprep.subr.mxu0 0.0
        %531 = vmatpush2.xpose.msra.mxu0 0.0
        %532 = vmatprep.subr.mxu0 0.0
        %533 = vmatpush2.xpose.msra.mxu0 0.0
        %534 = vmatprep.subr.mxu0 0.0
        %535 = vmatpush2.xpose.msra.mxu0 0.0
        %536 = vmatprep.subr.mxu0 0.0
        %537 = vmatpush2.xpose.msra.mxu0 0.0
        %538 = vmatprep.subr.mxu0 0.0
        %539 = vmatpush2.xpose.msra.mxu0 0.0
        %540 = vmatprep.subr.mxu0 0.0
        %541 = vmatpush2.xpose.msra.mxu0 0.0
        %542 = vmatprep.mubr.f32.mxu0 0.0
        %v543 = vand.u32 %v319, 4294901760
        %v544 = vsub.f32 %v319, %v543
        %545 = vmatmul.mubr.f32.gmra.mxu0 %v544
        %v546 = vpop.f32.mrf.mxu0
        %v547 = vadd.f32 %v473, %v546
        %v548 = vpop.f32.mrf.mxu0
        %549 = vdwg.mxu0
        %550 = vmatprep.subr.mxu0 0.0
        %551 = vmatpush1.xpose.msra.mxu0 0.0
        %552 = vmatprep.subr.mxu0 0.0
        %553 = vmatpush1.xpose.msra.mxu0 0.0
        %554 = vmatprep.subr.mxu0 0.0
        %555 = vmatpush1.xpose.msra.mxu0 0.0
        %556 = vmatprep.subr.mxu0 0.0
        %557 = vmatpush1.xpose.msra.mxu0 0.0
        %558 = vmatprep.subr.mxu0 0.0
        %559 = vmatpush1.xpose.msra.mxu0 0.0
        %560 = vmatprep.subr.mxu0 0.0
        %561 = vmatpush1.xpose.msra.mxu0 0.0
        %562 = vmatprep.subr.mxu0 0.0
        %563 = vmatpush1.xpose.msra.mxu0 0.0
        %564 = vmatprep.subr.mxu0 0.0
        %565 = vmatpush1.xpose.msra.mxu0 0.0
        %566 = vmatprep.subr.mxu0 0.0
        %567 = vmatpush1.xpose.msra.mxu0 0.0
        %568 = vmatprep.subr.mxu0 0.0
        %569 = vmatpush1.xpose.msra.mxu0 0.0
        %570 = vmatprep.subr.mxu0 0.0
        %571 = vmatpush1.xpose.msra.mxu0 0.0
        %572 = vmatprep.subr.mxu0 0.0
        %573 = vmatpush1.xpose.msra.mxu0 0.0
        %574 = vmatprep.subr.mxu0 0.0
        %575 = vmatpush1.xpose.msra.mxu0 0.0
        %576 = vmatprep.subr.mxu0 0.0
        %577 = vmatpush1.xpose.msra.mxu0 0.0
        %578 = vmatprep.subr.mxu0 0.0
        %579 = vmatpush1.xpose.msra.mxu0 0.0
        %580 = vmatprep.subr.mxu0 0.0
        %v581 = vand.u32 %v322, 4294901760
        %582 = vmatpush1.xpose.msra.mxu0 %v581
        %583 = vmatprep.subr.mxu0 0.0
        %584 = vmatpush2.xpose.msra.mxu0 0.0
        %585 = vmatprep.subr.mxu0 0.0
        %586 = vmatpush2.xpose.msra.mxu0 0.0
        %587 = vmatprep.subr.mxu0 0.0
        %588 = vmatpush2.xpose.msra.mxu0 0.0
        %589 = vmatprep.subr.mxu0 0.0
        %590 = vmatpush2.xpose.msra.mxu0 0.0
        %591 = vmatprep.subr.mxu0 0.0
        %592 = vmatpush2.xpose.msra.mxu0 0.0
        %593 = vmatprep.subr.mxu0 0.0
        %594 = vmatpush2.xpose.msra.mxu0 0.0
        %595 = vmatprep.subr.mxu0 0.0
        %596 = vmatpush2.xpose.msra.mxu0 0.0
        %597 = vmatprep.subr.mxu0 0.0
        %598 = vmatpush2.xpose.msra.mxu0 0.0
        %599 = vmatprep.subr.mxu0 0.0
        %600 = vmatpush2.xpose.msra.mxu0 0.0
        %601 = vmatprep.subr.mxu0 0.0
        %602 = vmatpush2.xpose.msra.mxu0 0.0
        %603 = vmatprep.subr.mxu0 0.0
        %604 = vmatpush2.xpose.msra.mxu0 0.0
        %605 = vmatprep.subr.mxu0 0.0
        %606 = vmatpush2.xpose.msra.mxu0 0.0
        %607 = vmatprep.subr.mxu0 0.0
        %608 = vmatpush2.xpose.msra.mxu0 0.0
        %609 = vmatprep.subr.mxu0 0.0
        %610 = vmatpush2.xpose.msra.mxu0 0.0
        %611 = vmatprep.subr.mxu0 0.0
        %612 = vmatpush2.xpose.msra.mxu0 0.0
        %613 = vmatprep.subr.mxu0 0.0
        %614 = vmatpush2.xpose.msra.mxu0 0.0
        %615 = vmatprep.mubr.f32.mxu0 0.0
        %v616 = vand.u32 %v319, 4294901760
        %v617 = vsub.f32 %v319, %v616
        %v618 = vand.u32 %v617, 4294901760
        %619 = vmatmul.mubr.f32.gmra.mxu0 %v618
        %v620 = vpop.f32.mrf.mxu0
        %v621 = vadd.f32 %v547, %v620
        %v622 = vpop.f32.mrf.mxu0
        %623 = vdwg.mxu0
        %624 = vmatprep.subr.mxu0 0.0
        %625 = vmatpush1.xpose.msra.mxu0 0.0
        %626 = vmatprep.subr.mxu0 0.0
        %627 = vmatpush1.xpose.msra.mxu0 0.0
        %628 = vmatprep.subr.mxu0 0.0
        %629 = vmatpush1.xpose.msra.mxu0 0.0
        %630 = vmatprep.subr.mxu0 0.0
        %631 = vmatpush1.xpose.msra.mxu0 0.0
        %632 = vmatprep.subr.mxu0 0.0
        %633 = vmatpush1.xpose.msra.mxu0 0.0
        %634 = vmatprep.subr.mxu0 0.0
        %635 = vmatpush1.xpose.msra.mxu0 0.0
        %636 = vmatprep.subr.mxu0 0.0
        %637 = vmatpush1.xpose.msra.mxu0 0.0
        %638 = vmatprep.subr.mxu0 0.0
        %639 = vmatpush1.xpose.msra.mxu0 0.0
        %640 = vmatprep.subr.mxu0 0.0
        %641 = vmatpush1.xpose.msra.mxu0 0.0
        %642 = vmatprep.subr.mxu0 0.0
        %643 = vmatpush1.xpose.msra.mxu0 0.0
        %644 = vmatprep.subr.mxu0 0.0
        %645 = vmatpush1.xpose.msra.mxu0 0.0
        %646 = vmatprep.subr.mxu0 0.0
        %647 = vmatpush1.xpose.msra.mxu0 0.0
        %648 = vmatprep.subr.mxu0 0.0
        %649 = vmatpush1.xpose.msra.mxu0 0.0
        %650 = vmatprep.subr.mxu0 0.0
        %651 = vmatpush1.xpose.msra.mxu0 0.0
        %652 = vmatprep.subr.mxu0 0.0
        %653 = vmatpush1.xpose.msra.mxu0 0.0
        %654 = vmatprep.subr.mxu0 0.0
        %v655 = vand.u32 %v322, 4294901760
        %v656 = vsub.f32 %v322, %v655
        %v657 = vand.u32 %v656, 4294901760
        %658 = vmatpush1.xpose.msra.mxu0 %v657
        %659 = vmatprep.subr.mxu0 0.0
        %660 = vmatpush2.xpose.msra.mxu0 0.0
        %661 = vmatprep.subr.mxu0 0.0
        %662 = vmatpush2.xpose.msra.mxu0 0.0
        %663 = vmatprep.subr.mxu0 0.0
        %664 = vmatpush2.xpose.msra.mxu0 0.0
        %665 = vmatprep.subr.mxu0 0.0
        %666 = vmatpush2.xpose.msra.mxu0 0.0
        %667 = vmatprep.subr.mxu0 0.0
        %668 = vmatpush2.xpose.msra.mxu0 0.0
        %669 = vmatprep.subr.mxu0 0.0
        %670 = vmatpush2.xpose.msra.mxu0 0.0
        %671 = vmatprep.subr.mxu0 0.0
        %672 = vmatpush2.xpose.msra.mxu0 0.0
        %673 = vmatprep.subr.mxu0 0.0
        %674 = vmatpush2.xpose.msra.mxu0 0.0
        %675 = vmatprep.subr.mxu0 0.0
        %676 = vmatpush2.xpose.msra.mxu0 0.0
        %677 = vmatprep.subr.mxu0 0.0
        %678 = vmatpush2.xpose.msra.mxu0 0.0
        %679 = vmatprep.subr.mxu0 0.0
        %680 = vmatpush2.xpose.msra.mxu0 0.0
        %681 = vmatprep.subr.mxu0 0.0
        %682 = vmatpush2.xpose.msra.mxu0 0.0
        %683 = vmatprep.subr.mxu0 0.0
        %684 = vmatpush2.xpose.msra.mxu0 0.0
        %685 = vmatprep.subr.mxu0 0.0
        %686 = vmatpush2.xpose.msra.mxu0 0.0
        %687 = vmatprep.subr.mxu0 0.0
        %688 = vmatpush2.xpose.msra.mxu0 0.0
        %689 = vmatprep.subr.mxu0 0.0
        %690 = vmatpush2.xpose.msra.mxu0 0.0
        %691 = vmatprep.mubr.f32.mxu0 0.0
        %v692 = vand.u32 %v319, 4294901760
        %693 = vmatmul.mubr.f32.gmra.mxu0 %v692
        %v694 = vpop.f32.mrf.mxu0
        %v695 = vadd.f32 %v621, %v694
        %v696 = vpop.f32.mrf.mxu0
        %697 = vdwg.mxu0
        %698 = vmatprep.subr.mxu0 0.0
        %699 = vmatpush1.xpose.msra.mxu0 0.0
        %700 = vmatprep.subr.mxu0 0.0
        %701 = vmatpush1.xpose.msra.mxu0 0.0
        %702 = vmatprep.subr.mxu0 0.0
        %703 = vmatpush1.xpose.msra.mxu0 0.0
        %704 = vmatprep.subr.mxu0 0.0
        %705 = vmatpush1.xpose.msra.mxu0 0.0
        %706 = vmatprep.subr.mxu0 0.0
        %707 = vmatpush1.xpose.msra.mxu0 0.0
        %708 = vmatprep.subr.mxu0 0.0
        %709 = vmatpush1.xpose.msra.mxu0 0.0
        %710 = vmatprep.subr.mxu0 0.0
        %711 = vmatpush1.xpose.msra.mxu0 0.0
        %712 = vmatprep.subr.mxu0 0.0
        %713 = vmatpush1.xpose.msra.mxu0 0.0
        %714 = vmatprep.subr.mxu0 0.0
        %715 = vmatpush1.xpose.msra.mxu0 0.0
        %716 = vmatprep.subr.mxu0 0.0
        %717 = vmatpush1.xpose.msra.mxu0 0.0
        %718 = vmatprep.subr.mxu0 0.0
        %719 = vmatpush1.xpose.msra.mxu0 0.0
        %720 = vmatprep.subr.mxu0 0.0
        %721 = vmatpush1.xpose.msra.mxu0 0.0
        %722 = vmatprep.subr.mxu0 0.0
        %723 = vmatpush1.xpose.msra.mxu0 0.0
        %724 = vmatprep.subr.mxu0 0.0
        %725 = vmatpush1.xpose.msra.mxu0 0.0
        %726 = vmatprep.subr.mxu0 0.0
        %727 = vmatpush1.xpose.msra.mxu0 0.0
        %728 = vmatprep.subr.mxu0 0.0
        %v729 = vand.u32 %v322, 4294901760
        %730 = vmatpush1.xpose.msra.mxu0 %v729
        %731 = vmatprep.subr.mxu0 0.0
        %732 = vmatpush2.xpose.msra.mxu0 0.0
        %733 = vmatprep.subr.mxu0 0.0
        %734 = vmatpush2.xpose.msra.mxu0 0.0
        %735 = vmatprep.subr.mxu0 0.0
        %736 = vmatpush2.xpose.msra.mxu0 0.0
        %737 = vmatprep.subr.mxu0 0.0
        %738 = vmatpush2.xpose.msra.mxu0 0.0
        %739 = vmatprep.subr.mxu0 0.0
        %740 = vmatpush2.xpose.msra.mxu0 0.0
        %741 = vmatprep.subr.mxu0 0.0
        %742 = vmatpush2.xpose.msra.mxu0 0.0
        %743 = vmatprep.subr.mxu0 0.0
        %744 = vmatpush2.xpose.msra.mxu0 0.0
        %745 = vmatprep.subr.mxu0 0.0
        %746 = vmatpush2.xpose.msra.mxu0 0.0
        %747 = vmatprep.subr.mxu0 0.0
        %748 = vmatpush2.xpose.msra.mxu0 0.0
        %749 = vmatprep.subr.mxu0 0.0
        %750 = vmatpush2.xpose.msra.mxu0 0.0
        %751 = vmatprep.subr.mxu0 0.0
        %752 = vmatpush2.xpose.msra.mxu0 0.0
        %753 = vmatprep.subr.mxu0 0.0
        %754 = vmatpush2.xpose.msra.mxu0 0.0
        %755 = vmatprep.subr.mxu0 0.0
        %756 = vmatpush2.xpose.msra.mxu0 0.0
        %757 = vmatprep.subr.mxu0 0.0
        %758 = vmatpush2.xpose.msra.mxu0 0.0
        %759 = vmatprep.subr.mxu0 0.0
        %760 = vmatpush2.xpose.msra.mxu0 0.0
        %761 = vmatprep.subr.mxu0 0.0
        %762 = vmatpush2.xpose.msra.mxu0 0.0
        %763 = vmatprep.mubr.f32.mxu0 0.0
        %v764 = vand.u32 %v319, 4294901760
        %765 = vmatmul.mubr.f32.gmra.mxu0 %v764
        %v766 = vpop.f32.mrf.mxu0
        %v767 = vadd.f32 %v695, %v766
        %v768 = vpop.f32.mrf.mxu0
        %769 = vdwg.mxu0
        %vm770 = vcmask 64512
        %v771 = vsel %vm770, %v767, -inf
        %772 = vmax.xlane.f32.xlu0 %v771
        %v773 = vpop.xlane.xlu0 %772
        %v774 = vsub.f32 %v767, %v773
        %v775 = vmul.f32 %v774, 1.442695
        %v776 = vpow.pop %v775
        %v777 = vsel %vm770, %v776, 0.0
        %778 = vadd.xlane.f32.xlu0 %v777
        %v779 = vpop.xlane.xlu0 %778
        %v780 = vrcp.pop %v779
        %v781 = vmul.f32 %v776, %v780
        %v783 = vsel %vm770, %v781, 0
        %785 = vmatprep.subr.mxu0 0.0
        %786 = vmatpush1.msra.mxu0 0.0
        %787 = vmatprep.subr.mxu0 0.0
        %788 = vmatpush1.msra.mxu0 0.0
        %789 = vmatprep.subr.mxu0 0.0
        %790 = vmatpush1.msra.mxu0 0.0
        %791 = vmatprep.subr.mxu0 0.0
        %792 = vmatpush1.msra.mxu0 0.0
        %793 = vmatprep.subr.mxu0 0.0
        %794 = vmatpush1.msra.mxu0 0.0
        %795 = vmatprep.subr.mxu0 0.0
        %796 = vmatpush1.msra.mxu0 0.0
        %797 = vmatprep.subr.mxu0 0.0
        %798 = vmatpush1.msra.mxu0 0.0
        %799 = vmatprep.subr.mxu0 0.0
        %800 = vmatpush1.msra.mxu0 0.0
        %801 = vmatprep.subr.mxu0 0.0
        %802 = vmatpush1.msra.mxu0 0.0
        %803 = vmatprep.subr.mxu0 0.0
        %804 = vmatpush1.msra.mxu0 0.0
        %805 = vmatprep.subr.mxu0 0.0
        %806 = vmatpush1.msra.mxu0 0.0
        %807 = vmatprep.subr.mxu0 0.0
        %808 = vmatpush1.msra.mxu0 0.0
        %809 = vmatprep.subr.mxu0 0.0
        %810 = vmatpush1.msra.mxu0 0.0
        %811 = vmatprep.subr.mxu0 0.0
        %812 = vmatpush1.msra.mxu0 0.0
        %813 = vmatprep.subr.mxu0 0.0
        %814 = vmatpush1.msra.mxu0 0.0
        %815 = vmatprep.subr.mxu0 0.0
        %v816 = vand.u32 %v316, 4294901760
        %817 = vmatpush1.msra.mxu0 %v816
        %818 = vmatprep.subr.mxu0 0.0
        %819 = vmatpush2.msra.mxu0 0.0
        %820 = vmatprep.subr.mxu0 0.0
        %821 = vmatpush2.msra.mxu0 0.0
        %822 = vmatprep.subr.mxu0 0.0
        %823 = vmatpush2.msra.mxu0 0.0
        %824 = vmatprep.subr.mxu0 0.0
        %825 = vmatpush2.msra.mxu0 0.0
        %826 = vmatprep.subr.mxu0 0.0
        %827 = vmatpush2.msra.mxu0 0.0
        %828 = vmatprep.subr.mxu0 0.0
        %829 = vmatpush2.msra.mxu0 0.0
        %830 = vmatprep.subr.mxu0 0.0
        %831 = vmatpush2.msra.mxu0 0.0
        %832 = vmatprep.subr.mxu0 0.0
        %833 = vmatpush2.msra.mxu0 0.0
        %834 = vmatprep.subr.mxu0 0.0
        %835 = vmatpush2.msra.mxu0 0.0
        %836 = vmatprep.subr.mxu0 0.0
        %837 = vmatpush2.msra.mxu0 0.0
        %838 = vmatprep.subr.mxu0 0.0
        %839 = vmatpush2.msra.mxu0 0.0
        %840 = vmatprep.subr.mxu0 0.0
        %841 = vmatpush2.msra.mxu0 0.0
        %842 = vmatprep.subr.mxu0 0.0
        %843 = vmatpush2.msra.mxu0 0.0
        %844 = vmatprep.subr.mxu0 0.0
        %845 = vmatpush2.msra.mxu0 0.0
        %846 = vmatprep.subr.mxu0 0.0
        %847 = vmatpush2.msra.mxu0 0.0
        %848 = vmatprep.subr.mxu0 0.0
        %849 = vmatpush2.msra.mxu0 0.0
        %850 = vmatprep.mubr.f32.mxu0 0.0
        %v851 = vand.u32 %v783, 4294901760
        %v852 = vsub.f32 %v783, %v851
        %v853 = vand.u32 %v852, 4294901760
        %v854 = vsub.f32 %v852, %v853
        %v855 = vand.u32 %v854, 4294901760
        %856 = vmatmul.mubr.f32.gmra.mxu0 %v855
        %v857 = vpop.f32.mrf.mxu0
        %v858 = vadd.f32 0.0, %v857
        %v859 = vpop.f32.mrf.mxu0
        %860 = vdwg.mxu0
        %861 = vmatprep.subr.mxu0 0.0
        %862 = vmatpush1.msra.mxu0 0.0
        %863 = vmatprep.subr.mxu0 0.0
        %864 = vmatpush1.msra.mxu0 0.0
        %865 = vmatprep.subr.mxu0 0.0
        %866 = vmatpush1.msra.mxu0 0.0
        %867 = vmatprep.subr.mxu0 0.0
        %868 = vmatpush1.msra.mxu0 0.0
        %869 = vmatprep.subr.mxu0 0.0
        %870 = vmatpush1.msra.mxu0 0.0
        %871 = vmatprep.subr.mxu0 0.0
        %872 = vmatpush1.msra.mxu0 0.0
        %873 = vmatprep.subr.mxu0 0.0
        %874 = vmatpush1.msra.mxu0 0.0
        %875 = vmatprep.subr.mxu0 0.0
        %876 = vmatpush1.msra.mxu0 0.0
        %877 = vmatprep.subr.mxu0 0.0
        %878 = vmatpush1.msra.mxu0 0.0
        %879 = vmatprep.subr.mxu0 0.0
        %880 = vmatpush1.msra.mxu0 0.0
        %881 = vmatprep.subr.mxu0 0.0
        %882 = vmatpush1.msra.mxu0 0.0
        %883 = vmatprep.subr.mxu0 0.0
        %884 = vmatpush1.msra.mxu0 0.0
        %885 = vmatprep.subr.mxu0 0.0
        %886 = vmatpush1.msra.mxu0 0.0
        %887 = vmatprep.subr.mxu0 0.0
        %888 = vmatpush1.msra.mxu0 0.0
        %889 = vmatprep.subr.mxu0 0.0
        %890 = vmatpush1.msra.mxu0 0.0
        %891 = vmatprep.subr.mxu0 0.0
        %v892 = vand.u32 %v316, 4294901760
        %v893 = vsub.f32 %v316, %v892
        %v894 = vand.u32 %v893, 4294901760
        %v895 = vsub.f32 %v893, %v894
        %v896 = vand.u32 %v895, 4294901760
        %897 = vmatpush1.msra.mxu0 %v896
        %898 = vmatprep.subr.mxu0 0.0
        %899 = vmatpush2.msra.mxu0 0.0
        %900 = vmatprep.subr.mxu0 0.0
        %901 = vmatpush2.msra.mxu0 0.0
        %902 = vmatprep.subr.mxu0 0.0
        %903 = vmatpush2.msra.mxu0 0.0
        %904 = vmatprep.subr.mxu0 0.0
        %905 = vmatpush2.msra.mxu0 0.0
        %906 = vmatprep.subr.mxu0 0.0
        %907 = vmatpush2.msra.mxu0 0.0
        %908 = vmatprep.subr.mxu0 0.0
        %909 = vmatpush2.msra.mxu0 0.0
        %910 = vmatprep.subr.mxu0 0.0
        %911 = vmatpush2.msra.mxu0 0.0
        %912 = vmatprep.subr.mxu0 0.0
        %913 = vmatpush2.msra.mxu0 0.0
        %914 = vmatprep.subr.mxu0 0.0
        %915 = vmatpush2.msra.mxu0 0.0
        %916 = vmatprep.subr.mxu0 0.0
        %917 = vmatpush2.msra.mxu0 0.0
        %918 = vmatprep.subr.mxu0 0.0
        %919 = vmatpush2.msra.mxu0 0.0
        %920 = vmatprep.subr.mxu0 0.0
        %921 = vmatpush2.msra.mxu0 0.0
        %922 = vmatprep.subr.mxu0 0.0
        %923 = vmatpush2.msra.mxu0 0.0
        %924 = vmatprep.subr.mxu0 0.0
        %925 = vmatpush2.msra.mxu0 0.0
        %926 = vmatprep.subr.mxu0 0.0
        %927 = vmatpush2.msra.mxu0 0.0
        %928 = vmatprep.subr.mxu0 0.0
        %929 = vmatpush2.msra.mxu0 0.0
        %930 = vmatprep.mubr.f32.mxu0 0.0
        %v931 = vand.u32 %v783, 4294901760
        %932 = vmatmul.mubr.f32.gmra.mxu0 %v931
        %v933 = vpop.f32.mrf.mxu0
        %v934 = vadd.f32 %v858, %v933
        %v935 = vpop.f32.mrf.mxu0
        %936 = vdwg.mxu0
        %937 = vmatprep.subr.mxu0 0.0
        %938 = vmatpush1.msra.mxu0 0.0
        %939 = vmatprep.subr.mxu0 0.0
        %940 = vmatpush1.msra.mxu0 0.0
        %941 = vmatprep.subr.mxu0 0.0
        %942 = vmatpush1.msra.mxu0 0.0
        %943 = vmatprep.subr.mxu0 0.0
        %944 = vmatpush1.msra.mxu0 0.0
        %945 = vmatprep.subr.mxu0 0.0
        %946 = vmatpush1.msra.mxu0 0.0
        %947 = vmatprep.subr.mxu0 0.0
        %948 = vmatpush1.msra.mxu0 0.0
        %949 = vmatprep.subr.mxu0 0.0
        %950 = vmatpush1.msra.mxu0 0.0
        %951 = vmatprep.subr.mxu0 0.0
        %952 = vmatpush1.msra.mxu0 0.0
        %953 = vmatprep.subr.mxu0 0.0
        %954 = vmatpush1.msra.mxu0 0.0
        %955 = vmatprep.subr.mxu0 0.0
        %956 = vmatpush1.msra.mxu0 0.0
        %957 = vmatprep.subr.mxu0 0.0
        %958 = vmatpush1.msra.mxu0 0.0
        %959 = vmatprep.subr.mxu0 0.0
        %960 = vmatpush1.msra.mxu0 0.0
        %961 = vmatprep.subr.mxu0 0.0
        %962 = vmatpush1.msra.mxu0 0.0
        %963 = vmatprep.subr.mxu0 0.0
        %964 = vmatpush1.msra.mxu0 0.0
        %965 = vmatprep.subr.mxu0 0.0
        %966 = vmatpush1.msra.mxu0 0.0
        %967 = vmatprep.subr.mxu0 0.0
        %v968 = vand.u32 %v316, 4294901760
        %v969 = vsub.f32 %v316, %v968
        %970 = vmatpush1.msra.mxu0 %v969
        %971 = vmatprep.subr.mxu0 0.0
        %972 = vmatpush2.msra.mxu0 0.0
        %973 = vmatprep.subr.mxu0 0.0
        %974 = vmatpush2.msra.mxu0 0.0
        %975 = vmatprep.subr.mxu0 0.0
        %976 = vmatpush2.msra.mxu0 0.0
        %977 = vmatprep.subr.mxu0 0.0
        %978 = vmatpush2.msra.mxu0 0.0
        %979 = vmatprep.subr.mxu0 0.0
        %980 = vmatpush2.msra.mxu0 0.0
        %981 = vmatprep.subr.mxu0 0.0
        %982 = vmatpush2.msra.mxu0 0.0
        %983 = vmatprep.subr.mxu0 0.0
        %984 = vmatpush2.msra.mxu0 0.0
        %985 = vmatprep.subr.mxu0 0.0
        %986 = vmatpush2.msra.mxu0 0.0
        %987 = vmatprep.subr.mxu0 0.0
        %988 = vmatpush2.msra.mxu0 0.0
        %989 = vmatprep.subr.mxu0 0.0
        %990 = vmatpush2.msra.mxu0 0.0
        %991 = vmatprep.subr.mxu0 0.0
        %992 = vmatpush2.msra.mxu0 0.0
        %993 = vmatprep.subr.mxu0 0.0
        %994 = vmatpush2.msra.mxu0 0.0
        %995 = vmatprep.subr.mxu0 0.0
        %996 = vmatpush2.msra.mxu0 0.0
        %997 = vmatprep.subr.mxu0 0.0
        %998 = vmatpush2.msra.mxu0 0.0
        %999 = vmatprep.subr.mxu0 0.0
        %1000 = vmatpush2.msra.mxu0 0.0
        %1001 = vmatprep.subr.mxu0 0.0
        %1002 = vmatpush2.msra.mxu0 0.0
        %1003 = vmatprep.mubr.f32.mxu0 0.0
        %v1004 = vand.u32 %v783, 4294901760
        %v1005 = vsub.f32 %v783, %v1004
        %1006 = vmatmul.mubr.f32.gmra.mxu0 %v1005
        %v1007 = vpop.f32.mrf.mxu0
        %v1008 = vadd.f32 %v934, %v1007
        %v1009 = vpop.f32.mrf.mxu0
        %1010 = vdwg.mxu0
        %1011 = vmatprep.subr.mxu0 0.0
        %1012 = vmatpush1.msra.mxu0 0.0
        %1013 = vmatprep.subr.mxu0 0.0
        %1014 = vmatpush1.msra.mxu0 0.0
        %1015 = vmatprep.subr.mxu0 0.0
        %1016 = vmatpush1.msra.mxu0 0.0
        %1017 = vmatprep.subr.mxu0 0.0
        %1018 = vmatpush1.msra.mxu0 0.0
        %1019 = vmatprep.subr.mxu0 0.0
        %1020 = vmatpush1.msra.mxu0 0.0
        %1021 = vmatprep.subr.mxu0 0.0
        %1022 = vmatpush1.msra.mxu0 0.0
        %1023 = vmatprep.subr.mxu0 0.0
        %1024 = vmatpush1.msra.mxu0 0.0
        %1025 = vmatprep.subr.mxu0 0.0
        %1026 = vmatpush1.msra.mxu0 0.0
        %1027 = vmatprep.subr.mxu0 0.0
        %1028 = vmatpush1.msra.mxu0 0.0
        %1029 = vmatprep.subr.mxu0 0.0
        %1030 = vmatpush1.msra.mxu0 0.0
        %1031 = vmatprep.subr.mxu0 0.0
        %1032 = vmatpush1.msra.mxu0 0.0
        %1033 = vmatprep.subr.mxu0 0.0
        %1034 = vmatpush1.msra.mxu0 0.0
        %1035 = vmatprep.subr.mxu0 0.0
        %1036 = vmatpush1.msra.mxu0 0.0
        %1037 = vmatprep.subr.mxu0 0.0
        %1038 = vmatpush1.msra.mxu0 0.0
        %1039 = vmatprep.subr.mxu0 0.0
        %1040 = vmatpush1.msra.mxu0 0.0
        %1041 = vmatprep.subr.mxu0 0.0
        %v1042 = vand.u32 %v316, 4294901760
        %1043 = vmatpush1.msra.mxu0 %v1042
        %1044 = vmatprep.subr.mxu0 0.0
        %1045 = vmatpush2.msra.mxu0 0.0
        %1046 = vmatprep.subr.mxu0 0.0
        %1047 = vmatpush2.msra.mxu0 0.0
        %1048 = vmatprep.subr.mxu0 0.0
        %1049 = vmatpush2.msra.mxu0 0.0
        %1050 = vmatprep.subr.mxu0 0.0
        %1051 = vmatpush2.msra.mxu0 0.0
        %1052 = vmatprep.subr.mxu0 0.0
        %1053 = vmatpush2.msra.mxu0 0.0
        %1054 = vmatprep.subr.mxu0 0.0
        %1055 = vmatpush2.msra.mxu0 0.0
        %1056 = vmatprep.subr.mxu0 0.0
        %1057 = vmatpush2.msra.mxu0 0.0
        %1058 = vmatprep.subr.mxu0 0.0
        %1059 = vmatpush2.msra.mxu0 0.0
        %1060 = vmatprep.subr.mxu0 0.0
        %1061 = vmatpush2.msra.mxu0 0.0
        %1062 = vmatprep.subr.mxu0 0.0
        %1063 = vmatpush2.msra.mxu0 0.0
        %1064 = vmatprep.subr.mxu0 0.0
        %1065 = vmatpush2.msra.mxu0 0.0
        %1066 = vmatprep.subr.mxu0 0.0
        %1067 = vmatpush2.msra.mxu0 0.0
        %1068 = vmatprep.subr.mxu0 0.0
        %1069 = vmatpush2.msra.mxu0 0.0
        %1070 = vmatprep.subr.mxu0 0.0
        %1071 = vmatpush2.msra.mxu0 0.0
        %1072 = vmatprep.subr.mxu0 0.0
        %1073 = vmatpush2.msra.mxu0 0.0
        %1074 = vmatprep.subr.mxu0 0.0
        %1075 = vmatpush2.msra.mxu0 0.0
        %1076 = vmatprep.mubr.f32.mxu0 0.0
        %v1077 = vand.u32 %v783, 4294901760
        %v1078 = vsub.f32 %v783, %v1077
        %v1079 = vand.u32 %v1078, 4294901760
        %1080 = vmatmul.mubr.f32.gmra.mxu0 %v1079
        %v1081 = vpop.f32.mrf.mxu0
        %v1082 = vadd.f32 %v1008, %v1081
        %v1083 = vpop.f32.mrf.mxu0
        %1084 = vdwg.mxu0
        %1085 = vmatprep.subr.mxu0 0.0
        %1086 = vmatpush1.msra.mxu0 0.0
        %1087 = vmatprep.subr.mxu0 0.0
        %1088 = vmatpush1.msra.mxu0 0.0
        %1089 = vmatprep.subr.mxu0 0.0
        %1090 = vmatpush1.msra.mxu0 0.0
        %1091 = vmatprep.subr.mxu0 0.0
        %1092 = vmatpush1.msra.mxu0 0.0
        %1093 = vmatprep.subr.mxu0 0.0
        %1094 = vmatpush1.msra.mxu0 0.0
        %1095 = vmatprep.subr.mxu0 0.0
        %1096 = vmatpush1.msra.mxu0 0.0
        %1097 = vmatprep.subr.mxu0 0.0
        %1098 = vmatpush1.msra.mxu0 0.0
        %1099 = vmatprep.subr.mxu0 0.0
        %1100 = vmatpush1.msra.mxu0 0.0
        %1101 = vmatprep.subr.mxu0 0.0
        %1102 = vmatpush1.msra.mxu0 0.0
        %1103 = vmatprep.subr.mxu0 0.0
        %1104 = vmatpush1.msra.mxu0 0.0
        %1105 = vmatprep.subr.mxu0 0.0
        %1106 = vmatpush1.msra.mxu0 0.0
        %1107 = vmatprep.subr.mxu0 0.0
        %1108 = vmatpush1.msra.mxu0 0.0
        %1109 = vmatprep.subr.mxu0 0.0
        %1110 = vmatpush1.msra.mxu0 0.0
        %1111 = vmatprep.subr.mxu0 0.0
        %1112 = vmatpush1.msra.mxu0 0.0
        %1113 = vmatprep.subr.mxu0 0.0
        %1114 = vmatpush1.msra.mxu0 0.0
        %1115 = vmatprep.subr.mxu0 0.0
        %v1116 = vand.u32 %v316, 4294901760
        %v1117 = vsub.f32 %v316, %v1116
        %v1118 = vand.u32 %v1117, 4294901760
        %1119 = vmatpush1.msra.mxu0 %v1118
        %1120 = vmatprep.subr.mxu0 0.0
        %1121 = vmatpush2.msra.mxu0 0.0
        %1122 = vmatprep.subr.mxu0 0.0
        %1123 = vmatpush2.msra.mxu0 0.0
        %1124 = vmatprep.subr.mxu0 0.0
        %1125 = vmatpush2.msra.mxu0 0.0
        %1126 = vmatprep.subr.mxu0 0.0
        %1127 = vmatpush2.msra.mxu0 0.0
        %1128 = vmatprep.subr.mxu0 0.0
        %1129 = vmatpush2.msra.mxu0 0.0
        %1130 = vmatprep.subr.mxu0 0.0
        %1131 = vmatpush2.msra.mxu0 0.0
        %1132 = vmatprep.subr.mxu0 0.0
        %1133 = vmatpush2.msra.mxu0 0.0
        %1134 = vmatprep.subr.mxu0 0.0
        %1135 = vmatpush2.msra.mxu0 0.0
        %1136 = vmatprep.subr.mxu0 0.0
        %1137 = vmatpush2.msra.mxu0 0.0
        %1138 = vmatprep.subr.mxu0 0.0
        %1139 = vmatpush2.msra.mxu0 0.0
        %1140 = vmatprep.subr.mxu0 0.0
        %1141 = vmatpush2.msra.mxu0 0.0
        %1142 = vmatprep.subr.mxu0 0.0
        %1143 = vmatpush2.msra.mxu0 0.0
        %1144 = vmatprep.subr.mxu0 0.0
        %1145 = vmatpush2.msra.mxu0 0.0
        %1146 = vmatprep.subr.mxu0 0.0
        %1147 = vmatpush2.msra.mxu0 0.0
        %1148 = vmatprep.subr.mxu0 0.0
        %1149 = vmatpush2.msra.mxu0 0.0
        %1150 = vmatprep.subr.mxu0 0.0
        %1151 = vmatpush2.msra.mxu0 0.0
        %1152 = vmatprep.mubr.f32.mxu0 0.0
        %v1153 = vand.u32 %v783, 4294901760
        %1154 = vmatmul.mubr.f32.gmra.mxu0 %v1153
        %v1155 = vpop.f32.mrf.mxu0
        %v1156 = vadd.f32 %v1082, %v1155
        %v1157 = vpop.f32.mrf.mxu0
        %1158 = vdwg.mxu0
        %1159 = vmatprep.subr.mxu0 0.0
        %1160 = vmatpush1.msra.mxu0 0.0
        %1161 = vmatprep.subr.mxu0 0.0
        %1162 = vmatpush1.msra.mxu0 0.0
        %1163 = vmatprep.subr.mxu0 0.0
        %1164 = vmatpush1.msra.mxu0 0.0
        %1165 = vmatprep.subr.mxu0 0.0
        %1166 = vmatpush1.msra.mxu0 0.0
        %1167 = vmatprep.subr.mxu0 0.0
        %1168 = vmatpush1.msra.mxu0 0.0
        %1169 = vmatprep.subr.mxu0 0.0
        %1170 = vmatpush1.msra.mxu0 0.0
        %1171 = vmatprep.subr.mxu0 0.0
        %1172 = vmatpush1.msra.mxu0 0.0
        %1173 = vmatprep.subr.mxu0 0.0
        %1174 = vmatpush1.msra.mxu0 0.0
        %1175 = vmatprep.subr.mxu0 0.0
        %1176 = vmatpush1.msra.mxu0 0.0
        %1177 = vmatprep.subr.mxu0 0.0
        %1178 = vmatpush1.msra.mxu0 0.0
        %1179 = vmatprep.subr.mxu0 0.0
        %1180 = vmatpush1.msra.mxu0 0.0
        %1181 = vmatprep.subr.mxu0 0.0
        %1182 = vmatpush1.msra.mxu0 0.0
        %1183 = vmatprep.subr.mxu0 0.0
        %1184 = vmatpush1.msra.mxu0 0.0
        %1185 = vmatprep.subr.mxu0 0.0
        %1186 = vmatpush1.msra.mxu0 0.0
        %1187 = vmatprep.subr.mxu0 0.0
        %1188 = vmatpush1.msra.mxu0 0.0
        %1189 = vmatprep.subr.mxu0 0.0
        %v1190 = vand.u32 %v316, 4294901760
        %1191 = vmatpush1.msra.mxu0 %v1190
        %1192 = vmatprep.subr.mxu0 0.0
        %1193 = vmatpush2.msra.mxu0 0.0
        %1194 = vmatprep.subr.mxu0 0.0
        %1195 = vmatpush2.msra.mxu0 0.0
        %1196 = vmatprep.subr.mxu0 0.0
        %1197 = vmatpush2.msra.mxu0 0.0
        %1198 = vmatprep.subr.mxu0 0.0
        %1199 = vmatpush2.msra.mxu0 0.0
        %1200 = vmatprep.subr.mxu0 0.0
        %1201 = vmatpush2.msra.mxu0 0.0
        %1202 = vmatprep.subr.mxu0 0.0
        %1203 = vmatpush2.msra.mxu0 0.0
        %1204 = vmatprep.subr.mxu0 0.0
        %1205 = vmatpush2.msra.mxu0 0.0
        %1206 = vmatprep.subr.mxu0 0.0
        %1207 = vmatpush2.msra.mxu0 0.0
        %1208 = vmatprep.subr.mxu0 0.0
        %1209 = vmatpush2.msra.mxu0 0.0
        %1210 = vmatprep.subr.mxu0 0.0
        %1211 = vmatpush2.msra.mxu0 0.0
        %1212 = vmatprep.subr.mxu0 0.0
        %1213 = vmatpush2.msra.mxu0 0.0
        %1214 = vmatprep.subr.mxu0 0.0
        %1215 = vmatpush2.msra.mxu0 0.0
        %1216 = vmatprep.subr.mxu0 0.0
        %1217 = vmatpush2.msra.mxu0 0.0
        %1218 = vmatprep.subr.mxu0 0.0
        %1219 = vmatpush2.msra.mxu0 0.0
        %1220 = vmatprep.subr.mxu0 0.0
        %1221 = vmatpush2.msra.mxu0 0.0
        %1222 = vmatprep.subr.mxu0 0.0
        %1223 = vmatpush2.msra.mxu0 0.0
        %1224 = vmatprep.mubr.f32.mxu0 0.0
        %v1225 = vand.u32 %v783, 4294901760
        %1226 = vmatmul.mubr.f32.gmra.mxu0 %v1225
        %v1227 = vpop.f32.mrf.mxu0
        %v1228 = vadd.f32 %v1156, %v1227
        %v1229 = vpop.f32.mrf.mxu0
        %1230 = vdwg.mxu0
        %1231 = vst.msk [vmem:[%s306] sm:$0xff] %vm317, %v1228
        %1232 = vst.msk [vmem:[%s313] sm:$0xff] %vm770, %v781
        %s1233 = sand.u32 %s130, 1
        %s1234 = scalar_lea.sflag [#allocation4], %s1233
        %s1235 = sand.u32 %s130, 1
        %s1236 = smul.addr %s1235, 8
        %s1237 = scalar_lea.vmem [#allocation8], %s1236
        %s1238 = sand.u32 %s158, 1
        %s1239 = scalar_lea.sflag [#allocation10], %s1238
        %s1240 = sand.u32 %s158, 1
        %s1241 = smul.addr %s1240, 8
        %s1242 = scalar_lea.vmem [#allocation9], %s1241
        // Predicated region
        $region45: #{luong_attention.1} parent=31 // pred_check
          %p1243 = pneg %p140
        $region46: #{luong_attention.1} parent=31 // pred_check_branch
          %1245 = sbr.rel (%p1243) target = $region48
        $region47: #{luong_attention.1} parent=31 // pred_region
          %s1247 = ssub.s32 128, 128
          %1248 = vsyncadd %s1234, %s1247
          %s1249 = sadd.s32 %s33, %s32
          %s1250 = smul.addr %s1249, 128
          %s1251 = scalar_lea.hbm %s3, %s1250
          %s1253 = sshll.u32 %s1237, 4
          %s1254 = int_to_ptr.vmem [resolvable:$true] %s1253
          %1256 = dma.vmem_to_hbm [thread:$0]  %s1254, 128, %s1251, %s1234
        $region48: #{luong_attention.1} parent=31 // pred_fallthru
          _
        // Predicated region
        $region49: #{luong_attention.1} parent=31 // pred_check
          %p1257 = pneg %p168
        $region50: #{luong_attention.1} parent=31 // pred_check_branch
          %1259 = sbr.rel (%p1257) target = $region52
        $region51: #{luong_attention.1} parent=31 // pred_region
          %s1261 = ssub.s32 128, 128
          %1262 = vsyncadd %s1239, %s1261
          %s1263 = sadd.s32 %s33, %s32
          %s1264 = smul.addr %s1263, 128
          %s1265 = scalar_lea.hbm %s4, %s1264
          %s1267 = sshll.u32 %s1242, 4
          %s1268 = int_to_ptr.vmem [resolvable:$true] %s1267
          %1270 = dma.vmem_to_hbm [thread:$0]  %s1268, 128, %s1265, %s1239
        $region52: #{luong_attention.1} parent=31 // pred_fallthru
          _
      $region32: #{luong_attention.1} parent=5 // pred_fallthru
        _
      %p1271 = scmp.le.s32.totalorder 2, %s23
      // Predicated region
      $region53: #{luong_attention.1} parent=5 // pred_check
        %p1272 = pneg %p1271
      $region54: #{luong_attention.1} parent=5 // pred_check_branch
        %1274 = sbr.rel (%p1272) target = $region56
      $region55: #{luong_attention.1} parent=5 // pred_region
        %s1275 = ssub.s32 %s23, 2
        // Predicated region
        $region57: #{luong_attention.1} parent=55 // pred_check
          %p1276 = pneg %p146
        $region58: #{luong_attention.1} parent=55 // pred_check_branch
          %1278 = sbr.rel (%p1276) target = $region60
        $region59: #{luong_attention.1} parent=55 // pred_region
          %s1279 = sand.u32 %s131, 1
          %s1280 = scalar_lea.sflag [#allocation4], %s1279
          %s1281 = sand.u32 %s131, 1
          %s1282 = smul.addr %s1281, 8
          %s1283 = scalar_lea.vmem [#allocation8], %s1282
          %1284 = dma.done %s1280, 128
        $region60: #{luong_attention.1} parent=55 // pred_fallthru
          _
        // Predicated region
        $region61: #{luong_attention.1} parent=55 // pred_check
          %p1285 = pneg %p174
        $region62: #{luong_attention.1} parent=55 // pred_check_branch
          %1287 = sbr.rel (%p1285) target = $region64
        $region63: #{luong_attention.1} parent=55 // pred_region
          %s1288 = sand.u32 %s159, 1
          %s1289 = scalar_lea.sflag [#allocation10], %s1288
          %s1290 = sand.u32 %s159, 1
          %s1291 = smul.addr %s1290, 8
          %s1292 = scalar_lea.vmem [#allocation9], %s1291
          %1293 = dma.done %s1289, 128
        $region64: #{luong_attention.1} parent=55 // pred_fallthru
          _
      $region56: #{luong_attention.1} parent=5 // pred_fallthru
        _
    $region6: #{luong_attention.1} parent=1 // loop_footer
      %s27 = sadd.s32 1, %s23
    $region7: #{luong_attention.1} parent=1 // loop_footer_branch
      %22 = sbr.rel target = $region3
    $region8: #{luong_attention.1} parent=1 // loop_exit
      _
    %1294 = vsyncpa [#allocation3], 1
    %s1295 = scalar_lea.sflag [#allocation3], 1
    %1296 = vsyncpa %s1295, 1
    %1297 = vsyncpa [#allocation6], 1
    %s1298 = scalar_lea.sflag [#allocation6], 1
    %1299 = vsyncpa %s1298, 1
    %1300 = vsyncpa [#allocation4], 1
    %s1301 = scalar_lea.sflag [#allocation4], 1
    %1302 = vsyncpa %s1301, 1
    %1303 = vsyncpa [#allocation10], 1
    %s1304 = scalar_lea.sflag [#allocation10], 1
    %1305 = vsyncpa %s1304, 1

</llo_original>
